<compile_context>
chip_gen: v7x
topology: tpu7x:2x2x1
jax: 0.10.0
libtpu: 0.0.40
codegen_flags: <defaults>
</compile_context>

<pallas_src>
import functools

import numpy as np
import jax
import jax.numpy as jnp
from jax import lax
from jax.experimental import pallas as pl
from jax.experimental.pallas import tpu as pltpu


def _round_up(v, m):
    return (v + m - 1) // m * m


# ---------------------------------------------------------------------------
# Pallas kernel: one batch tile of `bt` elements, all tensors 2D lane-dense.
# ---------------------------------------------------------------------------
def _graph_nonlocal_kernel(x_ref, xg_ref, wth_ref, bth_ref, wg_ref, bg_ref,
                           wph_ref, bph_ref, ww_ref, bw_ref, o_ref,
                           *, bt, n, group_size):
    m, _ = x_ref.shape                       # m = bt * n rows
    c_pad = wg_ref.shape[1]                  # padded inter-channels (128-multiple)
    ns = n // group_size

    x_f32 = x_ref[...]                       # original node order, f32 (residual)
    x_bf = x_f32.astype(jnp.bfloat16)
    xg_bf = xg_ref[...]                      # grouped node order, bf16 (pool path)

    # k=1 convs == matmuls over channels (weights pre-transposed to (in, out)).
    theta = jnp.dot(x_bf, wth_ref[...],
                    preferred_element_type=jnp.float32) + bth_ref[...]
    g_x = jnp.dot(xg_bf, wg_ref[...],
                  preferred_element_type=jnp.float32) + bg_ref[...]
    phi_x = jnp.dot(xg_bf, wph_ref[...],
                    preferred_element_type=jnp.float32) + bph_ref[...]

    # MaxPool1d(group_size) over consecutive grouped nodes; the padded 128-lane
    # channel axis stays minor through the reduce.
    g_sub = jnp.max(g_x.reshape(bt, ns, group_size, c_pad), axis=2)     # (bt,ns,C)
    phi_sub = jnp.max(phi_x.reshape(bt, ns, group_size, c_pad), axis=2)

    # Attention: f = theta @ phi^T over channels, softmax over the Ns pooled keys.
    th3 = theta.reshape(bt, n, c_pad).astype(jnp.bfloat16)
    f = lax.dot_general(th3, phi_sub.astype(jnp.bfloat16),
                        (((2,), (2,)), ((0,), (0,))),
                        preferred_element_type=jnp.float32)             # (bt,n,ns)
    f = f - jnp.max(f, axis=-1, keepdims=True)
    p = jnp.exp(f)
    inv = pl.reciprocal(jnp.sum(p, axis=-1, keepdims=True), approx=False)
    f_div_c = p * inv

    # y = softmax @ g_sub
    y = lax.dot_general(f_div_c.astype(jnp.bfloat16), g_sub.astype(jnp.bfloat16),
                        (((2,), (1,)), ((0,), (0,))),
                        preferred_element_type=jnp.float32)             # (bt,n,C)
    y2d = y.reshape(m, c_pad).astype(jnp.bfloat16)

    # W conv (eval-mode BatchNorm folded into weights/bias) + residual, f32 epilogue.
    w_y = jnp.dot(y2d, ww_ref[...],
                  preferred_element_type=jnp.float32) + bw_ref[...]
    o_ref[...] = (w_y + x_f32).astype(o_ref.dtype)


# ---------------------------------------------------------------------------
# Wrapper: host-side weight prep (transpose / pad / bf16 / BN fold) + pallas_call.
# ---------------------------------------------------------------------------
def graph_nonlocal_module(x, grouped_order, restored_order, params, group_size,
                          *, batch_tile=1):
    """Full _GraphNonLocal.forward.  x: (B, N, hid_dim) float32, original order."""
    B, N, F = x.shape
    go = np.asarray(grouped_order)
    ro = np.asarray(restored_order)
    assert N % group_size == 0, "MaxPool1d sub-sampling needs N % group_size == 0"
    # The fused (permutation-free) formulation requires restored == inverse(grouped).
    assert np.array_equal(np.argsort(go), ro), \
        "restored_order must be the inverse permutation of grouped_order"
    assert B % batch_tile == 0
    bt = batch_tile
    nb = B // bt
    rows = bt * N
    assert rows % 8 == 0 or nb == 1, "batch tile rows must be sublane-aligned"

    ci = params["wg"].shape[0]
    f_pad = _round_up(F, 128)
    c_pad = _round_up(ci, 128)

    # ---- parameters: transpose to (in, out), zero-pad to lane-dense, bf16, BN fold.
    def prep_w(w, in_pad, out_pad):                     # w: (out_ch, in_ch)
        wt = jnp.transpose(w)
        wt = jnp.pad(wt, ((0, in_pad - wt.shape[0]), (0, out_pad - wt.shape[1])))
        return wt.astype(jnp.bfloat16)

    def prep_b(b, out_pad):                             # b: (1, out_ch)
        return jnp.pad(b, ((0, 0), (0, out_pad - b.shape[1]))).astype(jnp.float32)

    wth_t = prep_w(params["wth"], f_pad, c_pad)
    wg_t = prep_w(params["wg"], f_pad, c_pad)
    wph_t = prep_w(params["wph"], f_pad, c_pad)
    bth_p = prep_b(params["bth"], c_pad)
    bg_p = prep_b(params["bg"], c_pad)
    bph_p = prep_b(params["bph"], c_pad)
    # Fold eval-mode BatchNorm1d into the W conv:  (y@ww^T + bw)*s + t == y@(ww^T*s) + (bw*s + t)
    ww_fold = jnp.transpose(params["ww"]) * params["bn_scale"]          # (ci, F)
    bw_fold = params["bw"] * params["bn_scale"] + params["bn_shift"]    # (1, F)
    ww_t = jnp.pad(ww_fold, ((0, c_pad - ci), (0, f_pad - F))).astype(jnp.bfloat16)
    bw_p = prep_b(bw_fold, f_pad)

    # ---- activations: x in original order (f32, theta + residual), grouped view
    # for the pooled g/phi path (bf16).  Lane-dense 2D (B*N, F_pad) slabs.
    x_pad = jnp.pad(x.astype(jnp.float32), ((0, 0), (0, 0), (0, f_pad - F)))
    x2d = x_pad.reshape(B * N, f_pad)
    xg2d = x_pad[:, go, :].reshape(B * N, f_pad).astype(jnp.bfloat16)
    # TODO(synk): the grouped view could instead be gathered in-kernel from a
    # scalar-prefetched index vector to save this extra O(B*N*F) HBM pass.

    row_spec = lambda i: (i, 0)
    rep_spec = lambda i: (0, 0)

    out2d = pl.pallas_call(
        functools.partial(_graph_nonlocal_kernel, bt=bt, n=N,
                          group_size=group_size),
        out_shape=jax.ShapeDtypeStruct((B * N, f_pad), x.dtype),
        grid_spec=pltpu.PrefetchScalarGridSpec(
            num_scalar_prefetch=0,
            grid=(nb,),                                  # batch tiles, pipelined
            in_specs=[
                pl.BlockSpec((rows, f_pad), row_spec),   # x  (original order)
                pl.BlockSpec((rows, f_pad), row_spec),   # xg (grouped order)
                pl.BlockSpec((f_pad, c_pad), rep_spec),  # theta weight
                pl.BlockSpec((1, c_pad), rep_spec),      # theta bias
                pl.BlockSpec((f_pad, c_pad), rep_spec),  # g weight
                pl.BlockSpec((1, c_pad), rep_spec),      # g bias
                pl.BlockSpec((f_pad, c_pad), rep_spec),  # phi weight
                pl.BlockSpec((1, c_pad), rep_spec),      # phi bias
                pl.BlockSpec((c_pad, f_pad), rep_spec),  # W weight (BN folded)
                pl.BlockSpec((1, f_pad), rep_spec),      # W bias   (BN folded)
            ],
            out_specs=pl.BlockSpec((rows, f_pad), row_spec),
        ),
        compiler_params=pltpu.CompilerParams(
            dimension_semantics=("parallel",)),          # v7x: split batch over TCs
    )(x2d, xg2d, wth_t, bth_p, wg_t, bg_p, wph_t, bph_p, ww_t, bw_p)

    # Free metadata ops: drop channel padding, restore (B, N, F).
    return out2d[:, :F].reshape(B, N, F)


# ---------------------------------------------------------------------------
# Pure-JAX reference (mirrors the PyTorch forward, NCW convs) for verification.
# ---------------------------------------------------------------------------
def reference(x, grouped_order, restored_order, params, group_size):
    xg = x[:, grouped_order, :]
    xt = jnp.swapaxes(xg, 1, 2)                          # (B, F, N)  NCW
    B, F, N = xt.shape
    ci = params["wg"].shape[0]
    ns = N // group_size

    def conv1(w, b, inp):                                # Conv1d, k=1
        return jnp.einsum("oc,bcn->bon", w, inp) + b[0][None, :, None]

    def pool(v):                                         # MaxPool1d(gs) over N
        return jnp.max(v.reshape(B, ci, ns, group_size), axis=-1)

    g_x = pool(conv1(params["wg"], params["bg"], xt))            # (B, Ci, Ns)
    g_x = jnp.swapaxes(g_x, 1, 2)                                # (B, Ns, Ci)
    theta_x = jnp.swapaxes(conv1(params["wth"], params["bth"], xt), 1, 2)  # (B,N,Ci)
    phi_x = pool(conv1(params["wph"], params["bph"], xt))        # (B, Ci, Ns)

    f = jnp.einsum("bnc,bcs->bns", theta_x, phi_x)               # (B, N, Ns)
    f = jax.nn.softmax(f, axis=-1)
    y = jnp.einsum("bns,bsc->bnc", f, g_x)                       # (B, N, Ci)
    y = jnp.swapaxes(y, 1, 2)                                    # (B, Ci, N)
    w_y = conv1(params["ww"], params["bw"], y)                   # (B, F, N)
    w_y = w_y * params["bn_scale"][0][None, :, None] + \
        params["bn_shift"][0][None, :, None]
    z = w_y + xt
    out = jnp.swapaxes(z, 1, 2)
    return out[:, restored_order, :]


# ---------------------------------------------------------------------------
if __name__ == "__main__":
    B, N, hid_dim, group_size = 2, 16, 32, 4
    ci = hid_dim // 2                                    # inter_channels

    key = jax.random.PRNGKey(0)
    keys = jax.random.split(key, 12)

    # Deterministic node permutation and its inverse.
    grouped_order = jnp.array(
        np.random.RandomState(0).permutation(N), dtype=jnp.int32)
    restored_order = jnp.argsort(grouped_order).astype(jnp.int32)

    def init(k, shape, scale=0.1):
        return (scale * jax.random.normal(k, shape)).astype(jnp.float32)

    # Conv1d(k=1) weights: (out_ch, in_ch); biases kept 2D (1, out_ch).
    params = {
        "wg":  init(keys[0], (ci, hid_dim)), "bg":  init(keys[1], (1, ci)),
        "wth": init(keys[2], (ci, hid_dim)), "bth": init(keys[3], (1, ci)),
        "wph": init(keys[4], (ci, hid_dim)), "bph": init(keys[5], (1, ci)),
        "ww":  init(keys[6], (hid_dim, ci)), "bw":  init(keys[7], (1, hid_dim)),
    }
    # BatchNorm1d (eval mode): scale = gamma/sqrt(var+eps), shift = beta - mean*scale
    gamma = 1.0 + init(keys[8], (1, hid_dim))
    beta = init(keys[9], (1, hid_dim))
    run_mean = jnp.zeros((1, hid_dim), jnp.float32)
    run_var = jnp.ones((1, hid_dim), jnp.float32)
    eps = 1e-5
    params["bn_scale"] = (gamma / jnp.sqrt(run_var + eps)).astype(jnp.float32)
    params["bn_shift"] = (beta - run_mean * params["bn_scale"]).astype(jnp.float32)
    # TODO(synk): training-mode BatchNorm1d (batch statistics) not implemented;
    # eval-mode running stats are folded into the W conv instead.

    x = jax.random.normal(keys[10], (B, N, hid_dim), dtype=jnp.float32)

    out = graph_nonlocal_module(x, grouped_order, restored_order, params,
                                group_size, batch_tile=1)
    out = jax.block_until_ready(out)

    ref = reference(x, grouped_order, restored_order, params, group_size)
    # Tolerance reflects bf16 MXU operands (f32 accumulation, f32 epilogue).
    np.testing.assert_allclose(np.asarray(out), np.asarray(ref),
                               rtol=3e-2, atol=3e-2)
    print("KERNEL_OK")
</pallas_src>

<mosaic_0001>
module attributes {stable_mosaic.version = 11 : i64} {
  func.func @_graph_nonlocal_kernel(%arg0: i32, %arg1: memref<16x128xf32, #tpu.memory_space<vmem>>, %arg2: memref<16x128xbf16, #tpu.memory_space<vmem>>, %arg3: memref<128x128xbf16, #tpu.memory_space<vmem>>, %arg4: memref<1x128xf32, #tpu.memory_space<vmem>>, %arg5: memref<128x128xbf16, #tpu.memory_space<vmem>>, %arg6: memref<1x128xf32, #tpu.memory_space<vmem>>, %arg7: memref<128x128xbf16, #tpu.memory_space<vmem>>, %arg8: memref<1x128xf32, #tpu.memory_space<vmem>>, %arg9: memref<128x128xbf16, #tpu.memory_space<vmem>>, %arg10: memref<1x128xf32, #tpu.memory_space<vmem>>, %arg11: memref<16x128xf32, #tpu.memory_space<vmem>>) attributes {dimension_semantics = [#tpu.dimension_semantics<parallel>], iteration_bounds = array<i64: 2>, scalar_prefetch = 0 : i64, scratch_operands = 0 : i64, tpu.core_type = #tpu.core_type<tc>, window_params = [{transform_indices = @transform_0, window_bounds = array<i64: 16, 128>}, {transform_indices = @transform_1, window_bounds = array<i64: 16, 128>}, {pipeline_mode = #tpu.pipeline_mode<synchronous>, transform_indices = @transform_2, window_bounds = array<i64: 128, 128>}, {pipeline_mode = #tpu.pipeline_mode<synchronous>, transform_indices = @transform_3, window_bounds = array<i64: 1, 128>}, {pipeline_mode = #tpu.pipeline_mode<synchronous>, transform_indices = @transform_4, window_bounds = array<i64: 128, 128>}, {pipeline_mode = #tpu.pipeline_mode<synchronous>, transform_indices = @transform_5, window_bounds = array<i64: 1, 128>}, {pipeline_mode = #tpu.pipeline_mode<synchronous>, transform_indices = @transform_6, window_bounds = array<i64: 128, 128>}, {pipeline_mode = #tpu.pipeline_mode<synchronous>, transform_indices = @transform_7, window_bounds = array<i64: 1, 128>}, {pipeline_mode = #tpu.pipeline_mode<synchronous>, transform_indices = @transform_8, window_bounds = array<i64: 128, 128>}, {pipeline_mode = #tpu.pipeline_mode<synchronous>, transform_indices = @transform_9, window_bounds = array<i64: 1, 128>}, {transform_indices = @transform_10, window_bounds = array<i64: 16, 128>}]} {
    %c0 = arith.constant 0 : index
    %c0_0 = arith.constant 0 : index
    %0 = vector.load %arg1[%c0, %c0_0] : memref<16x128xf32, #tpu.memory_space<vmem>>, vector<16x128xf32>
    %1 = arith.truncf %0 : vector<16x128xf32> to vector<16x128xbf16>
    %c0_1 = arith.constant 0 : index
    %c0_2 = arith.constant 0 : index
    %2 = vector.load %arg2[%c0_1, %c0_2] : memref<16x128xbf16, #tpu.memory_space<vmem>>, vector<16x128xbf16>
    %c0_3 = arith.constant 0 : index
    %c0_4 = arith.constant 0 : index
    %3 = vector.load %arg3[%c0_3, %c0_4] : memref<128x128xbf16, #tpu.memory_space<vmem>>, vector<128x128xbf16>
    %cst = arith.constant dense<0.000000e+00> : vector<16x128xf32>
    %4 = tpu.matmul %1, %3, %cst {dimension_numbers = #tpu.dot_dimension_numbers<[1], [0], [0], [1], [0, 0, 1, 1], [], []>} : vector<16x128xbf16>, vector<128x128xbf16>, vector<16x128xf32> -> vector<16x128xf32>
    %c0_5 = arith.constant 0 : index
    %c0_6 = arith.constant 0 : index
    %5 = vector.load %arg4[%c0_5, %c0_6] : memref<1x128xf32, #tpu.memory_space<vmem>>, vector<1x128xf32>
    %6 = vector.broadcast %5 : vector<1x128xf32> to vector<16x128xf32>
    %7 = arith.addf %4, %6 : vector<16x128xf32>
    %c0_7 = arith.constant 0 : index
    %c0_8 = arith.constant 0 : index
    %8 = vector.load %arg5[%c0_7, %c0_8] : memref<128x128xbf16, #tpu.memory_space<vmem>>, vector<128x128xbf16>
    %cst_9 = arith.constant dense<0.000000e+00> : vector<16x128xf32>
    %9 = tpu.matmul %2, %8, %cst_9 {dimension_numbers = #tpu.dot_dimension_numbers<[1], [0], [0], [1], [0, 0, 1, 1], [], []>} : vector<16x128xbf16>, vector<128x128xbf16>, vector<16x128xf32> -> vector<16x128xf32>
    %c0_10 = arith.constant 0 : index
    %c0_11 = arith.constant 0 : index
    %10 = vector.load %arg6[%c0_10, %c0_11] : memref<1x128xf32, #tpu.memory_space<vmem>>, vector<1x128xf32>
    %11 = vector.broadcast %10 : vector<1x128xf32> to vector<16x128xf32>
    %12 = arith.addf %9, %11 : vector<16x128xf32>
    %c0_12 = arith.constant 0 : index
    %c0_13 = arith.constant 0 : index
    %13 = vector.load %arg7[%c0_12, %c0_13] : memref<128x128xbf16, #tpu.memory_space<vmem>>, vector<128x128xbf16>
    %cst_14 = arith.constant dense<0.000000e+00> : vector<16x128xf32>
    %14 = tpu.matmul %2, %13, %cst_14 {dimension_numbers = #tpu.dot_dimension_numbers<[1], [0], [0], [1], [0, 0, 1, 1], [], []>} : vector<16x128xbf16>, vector<128x128xbf16>, vector<16x128xf32> -> vector<16x128xf32>
    %c0_15 = arith.constant 0 : index
    %c0_16 = arith.constant 0 : index
    %15 = vector.load %arg8[%c0_15, %c0_16] : memref<1x128xf32, #tpu.memory_space<vmem>>, vector<1x128xf32>
    %16 = vector.broadcast %15 : vector<1x128xf32> to vector<16x128xf32>
    %17 = arith.addf %14, %16 : vector<16x128xf32>
    %18 = vector.shape_cast %12 : vector<16x128xf32> to vector<1x4x4x128xf32>
    %cst_17 = arith.constant dense<0xFF800000> : vector<1x4x128xf32>
    %19 = vector.multi_reduction <maximumf>, %18, %cst_17 [2] : vector<1x4x4x128xf32> to vector<1x4x128xf32>
    %20 = vector.shape_cast %17 : vector<16x128xf32> to vector<1x4x4x128xf32>
    %cst_18 = arith.constant dense<0xFF800000> : vector<1x4x128xf32>
    %21 = vector.multi_reduction <maximumf>, %20, %cst_18 [2] : vector<1x4x4x128xf32> to vector<1x4x128xf32>
    %22 = vector.shape_cast %7 : vector<16x128xf32> to vector<1x16x128xf32>
    %23 = arith.truncf %22 : vector<1x16x128xf32> to vector<1x16x128xbf16>
    %24 = arith.truncf %21 : vector<1x4x128xf32> to vector<1x4x128xbf16>
    %cst_19 = arith.constant dense<0.000000e+00> : vector<1x16x4xf32>
    %25 = tpu.matmul %23, %24, %cst_19 {dimension_numbers = #tpu.dot_dimension_numbers<[2], [2], [1], [1], [0, 0, 0, 1, 1, 1], [0], [0]>} : vector<1x16x128xbf16>, vector<1x4x128xbf16>, vector<1x16x4xf32> -> vector<1x16x4xf32>
    %cst_20 = arith.constant dense<0xFF800000> : vector<1x16xf32>
    %26 = vector.multi_reduction <maximumf>, %25, %cst_20 [2] : vector<1x16x4xf32> to vector<1x16xf32>
    %27 = vector.shape_cast %26 : vector<1x16xf32> to vector<1x16x1xf32>
    %28 = vector.broadcast %27 : vector<1x16x1xf32> to vector<1x16x4xf32>
    %29 = arith.subf %25, %28 : vector<1x16x4xf32>
    %30 = math.exp %29 : vector<1x16x4xf32>
    %cst_21 = arith.constant dense<0.000000e+00> : vector<1x16xf32>
    %31 = vector.multi_reduction <add>, %30, %cst_21 [2] : vector<1x16x4xf32> to vector<1x16xf32>
    %32 = vector.shape_cast %31 : vector<1x16xf32> to vector<1x16x1xf32>
    %33 = tpu.reciprocal %32 : vector<1x16x1xf32> -> vector<1x16x1xf32>
    %34 = vector.broadcast %33 : vector<1x16x1xf32> to vector<1x16x4xf32>
    %35 = arith.mulf %30, %34 : vector<1x16x4xf32>
    %36 = arith.truncf %35 : vector<1x16x4xf32> to vector<1x16x4xbf16>
    %37 = arith.truncf %19 : vector<1x4x128xf32> to vector<1x4x128xbf16>
    %cst_22 = arith.constant dense<0.000000e+00> : vector<1x16x128xf32>
    %38 = tpu.matmul %36, %37, %cst_22 {dimension_numbers = #tpu.dot_dimension_numbers<[2], [1], [1], [2], [0, 0, 0, 1, 1, 2], [0], [0]>} : vector<1x16x4xbf16>, vector<1x4x128xbf16>, vector<1x16x128xf32> -> vector<1x16x128xf32>
    %39 = vector.shape_cast %38 : vector<1x16x128xf32> to vector<16x128xf32>
    %40 = arith.truncf %39 : vector<16x128xf32> to vector<16x128xbf16>
    %c0_23 = arith.constant 0 : index
    %c0_24 = arith.constant 0 : index
    %41 = vector.load %arg9[%c0_23, %c0_24] : memref<128x128xbf16, #tpu.memory_space<vmem>>, vector<128x128xbf16>
    %cst_25 = arith.constant dense<0.000000e+00> : vector<16x128xf32>
    %42 = tpu.matmul %40, %41, %cst_25 {dimension_numbers = #tpu.dot_dimension_numbers<[1], [0], [0], [1], [0, 0, 1, 1], [], []>} : vector<16x128xbf16>, vector<128x128xbf16>, vector<16x128xf32> -> vector<16x128xf32>
    %c0_26 = arith.constant 0 : index
    %c0_27 = arith.constant 0 : index
    %43 = vector.load %arg10[%c0_26, %c0_27] : memref<1x128xf32, #tpu.memory_space<vmem>>, vector<1x128xf32>
    %44 = vector.broadcast %43 : vector<1x128xf32> to vector<16x128xf32>
    %45 = arith.addf %42, %44 : vector<16x128xf32>
    %46 = arith.addf %45, %0 : vector<16x128xf32>
    %c0_28 = arith.constant 0 : index
    %c0_29 = arith.constant 0 : index
    %47 = vector.load %arg11[%c0_28, %c0_29] : memref<16x128xf32, #tpu.memory_space<vmem>>, vector<16x128xf32>
    tpu.vector_store %arg11[%c0_28, %c0_29], %46 {strides = array<i32>} : memref<16x128xf32, #tpu.memory_space<vmem>>, vector<16x128xf32>,
    return
  }
  func.func @transform_0(%arg0: i32) -> (i32, i32) {
    %c0_i32 = arith.constant 0 : i32
    %c0_i32_0 = arith.constant 0 : i32
    return %arg0, %c0_i32 : i32, i32
  }
  func.func @transform_1(%arg0: i32) -> (i32, i32) {
    %c0_i32 = arith.constant 0 : i32
    %c0_i32_0 = arith.constant 0 : i32
    return %arg0, %c0_i32 : i32, i32
  }
  func.func @transform_2(%arg0: i32) -> (i32, i32) {
    %c0_i32 = arith.constant 0 : i32
    %c0_i32_0 = arith.constant 0 : i32
    %c0_i32_1 = arith.constant 0 : i32
    return %c0_i32, %c0_i32_0 : i32, i32
  }
  func.func @transform_3(%arg0: i32) -> (i32, i32) {
    %c0_i32 = arith.constant 0 : i32
    %c0_i32_0 = arith.constant 0 : i32
    %c0_i32_1 = arith.constant 0 : i32
    return %c0_i32, %c0_i32_0 : i32, i32
  }
  func.func @transform_4(%arg0: i32) -> (i32, i32) {
    %c0_i32 = arith.constant 0 : i32
    %c0_i32_0 = arith.constant 0 : i32
    %c0_i32_1 = arith.constant 0 : i32
    return %c0_i32, %c0_i32_0 : i32, i32
  }
  func.func @transform_5(%arg0: i32) -> (i32, i32) {
    %c0_i32 = arith.constant 0 : i32
    %c0_i32_0 = arith.constant 0 : i32
    %c0_i32_1 = arith.constant 0 : i32
    return %c0_i32, %c0_i32_0 : i32, i32
  }
  func.func @transform_6(%arg0: i32) -> (i32, i32) {
    %c0_i32 = arith.constant 0 : i32
    %c0_i32_0 = arith.constant 0 : i32
    %c0_i32_1 = arith.constant 0 : i32
    return %c0_i32, %c0_i32_0 : i32, i32
  }
  func.func @transform_7(%arg0: i32) -> (i32, i32) {
    %c0_i32 = arith.constant 0 : i32
    %c0_i32_0 = arith.constant 0 : i32
    %c0_i32_1 = arith.constant 0 : i32
    return %c0_i32, %c0_i32_0 : i32, i32
  }
  func.func @transform_8(%arg0: i32) -> (i32, i32) {
    %c0_i32 = arith.constant 0 : i32
    %c0_i32_0 = arith.constant 0 : i32
    %c0_i32_1 = arith.constant 0 : i32
    return %c0_i32, %c0_i32_0 : i32, i32
  }
  func.func @transform_9(%arg0: i32) -> (i32, i32) {
    %c0_i32 = arith.constant 0 : i32
    %c0_i32_0 = arith.constant 0 : i32
    %c0_i32_1 = arith.constant 0 : i32
    return %c0_i32, %c0_i32_0 : i32, i32
  }
  func.func @transform_10(%arg0: i32) -> (i32, i32) {
    %c0_i32 = arith.constant 0 : i32
    %c0_i32_0 = arith.constant 0 : i32
    return %arg0, %c0_i32 : i32, i32
  }
}

</mosaic_0001>

<llo_original>
// kernel: tpu_custom_call.1
$region0: #{tpu_custom_call.1}
  #allocation0 [shape = 'u32[]', space=smem, size = 0x4, offset = 0x4, fixed_abs, tag = 'smem constant byte address 0x4 - core index']
  #allocation1 [shape = 'u32[144,128]{1,0:T(1,128)}', space=vmem, size = 0x12000, scoped, tag = 'internal scratch']
  %s0 = inlined_call_operand.hbm [shape: f32[32,128], index: 0, kind: input, shape index: {}]
  %s1 = inlined_call_operand.hbm [shape: bf16[32,128], index: 1, kind: input, shape index: {}]
  %s2 = inlined_call_operand.hbm [shape: bf16[128,128], index: 2, kind: input, shape index: {}]
  %s3 = inlined_call_operand.vmem [shape: f32[1,128], index: 3, kind: input, shape index: {}]
  %s4 = inlined_call_operand.hbm [shape: bf16[128,128], index: 4, kind: input, shape index: {}]
  %s5 = inlined_call_operand.vmem [shape: f32[1,128], index: 5, kind: input, shape index: {}]
  %s6 = inlined_call_operand.hbm [shape: bf16[128,128], index: 6, kind: input, shape index: {}]
  %s7 = inlined_call_operand.vmem [shape: f32[1,128], index: 7, kind: input, shape index: {}]
  %s8 = inlined_call_operand.hbm [shape: bf16[128,128], index: 8, kind: input, shape index: {}]
  %s9 = inlined_call_operand.vmem [shape: f32[1,128], index: 9, kind: input, shape index: {}]
  %s10 = inlined_call_operand.hbm [shape: f32[32,128], index: 10, kind: output, shape index: {}]
  %s11 = sld [smem:[#allocation0]]
  $region97: #{tpu_custom_call.1} parent=0
    _
  %s13 = ssub.s32 1, %s11
  %s14 = scalar_select 0, %s13, %s11
  $region1: #{tpu_custom_call.1} parent=0
    #allocation2 [shape = 'u8[16384]{0}', space=vmem, size = 0x4000, scoped, tag = 'input window, operand 0']
    #allocation3 [shape = 's32[2]{0}', space=sflag, size = 0x8, scoped, tag = 'scoped memory for tpu_custom_call.1']
    #allocation4 [shape = 's32[2]{0}', space=sflag, size = 0x8, scoped, tag = 'scoped memory for tpu_custom_call.1']
    #allocation5 [shape = 'u8[8192]{0}', space=vmem, size = 0x2000, scoped, tag = 'input window, operand 1']
    #allocation6 [shape = 's32[2]{0}', space=sflag, size = 0x8, scoped, tag = 'scoped memory for tpu_custom_call.1']
    #allocation7 [shape = 'u8[32768]{0}', space=vmem, size = 0x8000, scoped, tag = 'input window, operand 2, single buffered']
    #allocation8 [shape = 'u8[32768]{0}', space=vmem, size = 0x8000, scoped, tag = 'input window, operand 4, single buffered']
    #allocation9 [shape = 's32[1]{0}', space=sflag, size = 0x4, scoped, tag = 'scoped memory for tpu_custom_call.1']
    #allocation10 [shape = 'u8[32768]{0}', space=vmem, size = 0x8000, scoped, tag = 'input window, operand 6, single buffered']
    #allocation11 [shape = 'u8[32768]{0}', space=vmem, size = 0x8000, scoped, tag = 'input window, operand 8, single buffered']
    #allocation12 [shape = 's32[1]{0}', space=sflag, size = 0x4, scoped, tag = 'scoped memory for tpu_custom_call.1']
    #allocation13 [shape = 'u8[16384]{0}', space=vmem, size = 0x4000, scoped, tag = 'output window, operand 0']
    %15 = vsyncpa [#allocation3], 0
    %s16 = scalar_lea.sflag [#allocation3], 1
    %17 = vsyncpa %s16, 0
    %18 = vsyncpa [#allocation6], 0
    %s19 = scalar_lea.sflag [#allocation6], 1
    %20 = vsyncpa %s19, 0
    %21 = vsyncpa [#allocation9], 0
    %22 = vsyncpa [#allocation12], 0
    %23 = vsyncpa [#allocation4], 0
    %s24 = scalar_lea.sflag [#allocation4], 1
    %25 = vsyncpa %s24, 0
    loop: start=0, step=1, limit=4
    $region2: #{tpu_custom_call.1} parent=1 // loop_pre_header
      _
    $region3: #{tpu_custom_call.1} parent=1 // loop_header
      %s27 = sphi 0, %s31
      %p28 = scmp.ge.s32.totalorder %s27, 4
      %s37 = sphi 0, %s39
      %s40 = sphi 0, %s37
      %s41 = sphi 0, %s40
      %s57 = sphi 0, %s41
      %s63 = sphi 0, %s65
      %s66 = sphi 0, %s63
      %s67 = sphi 0, %s66
      %s83 = sphi 0, %s67
      %s87 = sphi 0, %s87
      %s89 = sphi 0, %s87
      %s90 = sphi 0, %s89
      %s104 = sphi 0, %s90
      %s108 = sphi 0, %s108
      %s110 = sphi 0, %s108
      %s111 = sphi 0, %s110
      %s125 = sphi 0, %s111
      %s129 = sphi 0, %s129
      %s131 = sphi 0, %s129
      %s132 = sphi 0, %s131
      %s146 = sphi 0, %s132
      %s150 = sphi 0, %s150
      %s152 = sphi 0, %s150
      %s153 = sphi 0, %s152
      %s167 = sphi 0, %s153
      %s171 = sphi 0, %s171
      %s173 = sphi 0, %s171
      %s174 = sphi 0, %s173
      %s188 = sphi 0, %s174
      %s192 = sphi 0, %s192
      %s194 = sphi 0, %s192
      %s195 = sphi 0, %s194
      %s209 = sphi 0, %s195
      %s213 = sphi 0, %s213
      %s215 = sphi 0, %s213
      %s216 = sphi 0, %s215
      %s230 = sphi 0, %s216
      %s234 = sphi 0, %s234
      %s236 = sphi 0, %s234
      %s237 = sphi 0, %s236
      %s251 = sphi 0, %s237
      %s257 = sphi 0, %s259
      %s260 = sphi 0, %s257
      %s261 = sphi 0, %s260
      %s277 = sphi 0, %s261
    $region4: #{tpu_custom_call.1} parent=1 // loop_header_branch
      %30 = sbr.rel (%p28) target = $region8
    $region5: #{tpu_custom_call.1} parent=1 // loop_body
      %s32 = ssub.s32 %s27, 1
      %s33 = ssub.s32 %s27, 2
      %s34 = sadd.s32 %s27, 1
      %s35 = ssub.s32 %s27, %s34
      %p36 = scmp.eq.s32.totalorder %s35, 0
      %s38 = sadd.s32 %s37, 1
      %s39 = scalar_select %p36, %s37, %s38
      %p42 = pneg %p36
      %p43 = scmp.eq.s32.totalorder %s27, 1
      %p44 = por %p42, %p43
      %p45 = scmp.ne.s32.totalorder %s37, %s40
      %p46 = scmp.eq.s32.totalorder %s27, 0
      %p47 = por %p45, %p46
      %p48 = scmp.ne.s32.totalorder %s37, %s40
      %p49 = scmp.eq.s32.totalorder %s32, 1
      %p50 = por %p48, %p49
      %p51 = scmp.ne.s32.totalorder %s40, %s41
      %p52 = scmp.eq.s32.totalorder %s32, 0
      %p53 = por %p51, %p52
      %p54 = scmp.ne.s32.totalorder %s40, %s41
      %p55 = scmp.eq.s32.totalorder %s33, 1
      %p56 = por %p54, %p55
      %p58 = scmp.ne.s32.totalorder %s41, %s57
      %p59 = scmp.eq.s32.totalorder %s33, 0
      %p60 = por %p58, %p59
      %s61 = ssub.s32 %s27, %s34
      %p62 = scmp.eq.s32.totalorder %s61, 0
      %s64 = sadd.s32 %s63, 1
      %s65 = scalar_select %p62, %s63, %s64
      %p68 = pneg %p62
      %p69 = scmp.eq.s32.totalorder %s27, 1
      %p70 = por %p68, %p69
      %p71 = scmp.ne.s32.totalorder %s63, %s66
      %p72 = scmp.eq.s32.totalorder %s27, 0
      %p73 = por %p71, %p72
      %p74 = scmp.ne.s32.totalorder %s63, %s66
      %p75 = scmp.eq.s32.totalorder %s32, 1
      %p76 = por %p74, %p75
      %p77 = scmp.ne.s32.totalorder %s66, %s67
      %p78 = scmp.eq.s32.totalorder %s32, 0
      %p79 = por %p77, %p78
      %p80 = scmp.ne.s32.totalorder %s66, %s67
      %p81 = scmp.eq.s32.totalorder %s33, 1
      %p82 = por %p80, %p81
      %p84 = scmp.ne.s32.totalorder %s67, %s83
      %p85 = scmp.eq.s32.totalorder %s33, 0
      %p86 = por %p84, %p85
      %s88 = sadd.s32 %s87, 1
      %p91 = scmp.eq.s32.totalorder %s27, 1
      %p92 = scmp.ne.s32.totalorder %s87, %s89
      %p93 = scmp.eq.s32.totalorder %s27, 0
      %p94 = por %p92, %p93
      %p95 = scmp.ne.s32.totalorder %s87, %s89
      %p96 = scmp.eq.s32.totalorder %s32, 1
      %p97 = por %p95, %p96
      %p98 = scmp.ne.s32.totalorder %s89, %s90
      %p99 = scmp.eq.s32.totalorder %s32, 0
      %p100 = por %p98, %p99
      %p101 = scmp.ne.s32.totalorder %s89, %s90
      %p102 = scmp.eq.s32.totalorder %s33, 1
      %p103 = por %p101, %p102
      %p105 = scmp.ne.s32.totalorder %s90, %s104
      %p106 = scmp.eq.s32.totalorder %s33, 0
      %p107 = por %p105, %p106
      %s109 = sadd.s32 %s108, 1
      %p112 = scmp.eq.s32.totalorder %s27, 1
      %p113 = scmp.ne.s32.totalorder %s108, %s110
      %p114 = scmp.eq.s32.totalorder %s27, 0
      %p115 = por %p113, %p114
      %p116 = scmp.ne.s32.totalorder %s108, %s110
      %p117 = scmp.eq.s32.totalorder %s32, 1
      %p118 = por %p116, %p117
      %p119 = scmp.ne.s32.totalorder %s110, %s111
      %p120 = scmp.eq.s32.totalorder %s32, 0
      %p121 = por %p119, %p120
      %p122 = scmp.ne.s32.totalorder %s110, %s111
      %p123 = scmp.eq.s32.totalorder %s33, 1
      %p124 = por %p122, %p123
      %p126 = scmp.ne.s32.totalorder %s111, %s125
      %p127 = scmp.eq.s32.totalorder %s33, 0
      %p128 = por %p126, %p127
      %s130 = sadd.s32 %s129, 1
      %p133 = scmp.eq.s32.totalorder %s27, 1
      %p134 = scmp.ne.s32.totalorder %s129, %s131
      %p135 = scmp.eq.s32.totalorder %s27, 0
      %p136 = por %p134, %p135
      %p137 = scmp.ne.s32.totalorder %s129, %s131
      %p138 = scmp.eq.s32.totalorder %s32, 1
      %p139 = por %p137, %p138
      %p140 = scmp.ne.s32.totalorder %s131, %s132
      %p141 = scmp.eq.s32.totalorder %s32, 0
      %p142 = por %p140, %p141
      %p143 = scmp.ne.s32.totalorder %s131, %s132
      %p144 = scmp.eq.s32.totalorder %s33, 1
      %p145 = por %p143, %p144
      %p147 = scmp.ne.s32.totalorder %s132, %s146
      %p148 = scmp.eq.s32.totalorder %s33, 0
      %p149 = por %p147, %p148
      %s151 = sadd.s32 %s150, 1
      %p154 = scmp.eq.s32.totalorder %s27, 1
      %p155 = scmp.ne.s32.totalorder %s150, %s152
      %p156 = scmp.eq.s32.totalorder %s27, 0
      %p157 = por %p155, %p156
      %p158 = scmp.ne.s32.totalorder %s150, %s152
      %p159 = scmp.eq.s32.totalorder %s32, 1
      %p160 = por %p158, %p159
      %p161 = scmp.ne.s32.totalorder %s152, %s153
      %p162 = scmp.eq.s32.totalorder %s32, 0
      %p163 = por %p161, %p162
      %p164 = scmp.ne.s32.totalorder %s152, %s153
      %p165 = scmp.eq.s32.totalorder %s33, 1
      %p166 = por %p164, %p165
      %p168 = scmp.ne.s32.totalorder %s153, %s167
      %p169 = scmp.eq.s32.totalorder %s33, 0
      %p170 = por %p168, %p169
      %s172 = sadd.s32 %s171, 1
      %p175 = scmp.eq.s32.totalorder %s27, 1
      %p176 = scmp.ne.s32.totalorder %s171, %s173
      %p177 = scmp.eq.s32.totalorder %s27, 0
      %p178 = por %p176, %p177
      %p179 = scmp.ne.s32.totalorder %s171, %s173
      %p180 = scmp.eq.s32.totalorder %s32, 1
      %p181 = por %p179, %p180
      %p182 = scmp.ne.s32.totalorder %s173, %s174
      %p183 = scmp.eq.s32.totalorder %s32, 0
      %p184 = por %p182, %p183
      %p185 = scmp.ne.s32.totalorder %s173, %s174
      %p186 = scmp.eq.s32.totalorder %s33, 1
      %p187 = por %p185, %p186
      %p189 = scmp.ne.s32.totalorder %s174, %s188
      %p190 = scmp.eq.s32.totalorder %s33, 0
      %p191 = por %p189, %p190
      %s193 = sadd.s32 %s192, 1
      %p196 = scmp.eq.s32.totalorder %s27, 1
      %p197 = scmp.ne.s32.totalorder %s192, %s194
      %p198 = scmp.eq.s32.totalorder %s27, 0
      %p199 = por %p197, %p198
      %p200 = scmp.ne.s32.totalorder %s192, %s194
      %p201 = scmp.eq.s32.totalorder %s32, 1
      %p202 = por %p200, %p201
      %p203 = scmp.ne.s32.totalorder %s194, %s195
      %p204 = scmp.eq.s32.totalorder %s32, 0
      %p205 = por %p203, %p204
      %p206 = scmp.ne.s32.totalorder %s194, %s195
      %p207 = scmp.eq.s32.totalorder %s33, 1
      %p208 = por %p206, %p207
      %p210 = scmp.ne.s32.totalorder %s195, %s209
      %p211 = scmp.eq.s32.totalorder %s33, 0
      %p212 = por %p210, %p211
      %s214 = sadd.s32 %s213, 1
      %p217 = scmp.eq.s32.totalorder %s27, 1
      %p218 = scmp.ne.s32.totalorder %s213, %s215
      %p219 = scmp.eq.s32.totalorder %s27, 0
      %p220 = por %p218, %p219
      %p221 = scmp.ne.s32.totalorder %s213, %s215
      %p222 = scmp.eq.s32.totalorder %s32, 1
      %p223 = por %p221, %p222
      %p224 = scmp.ne.s32.totalorder %s215, %s216
      %p225 = scmp.eq.s32.totalorder %s32, 0
      %p226 = por %p224, %p225
      %p227 = scmp.ne.s32.totalorder %s215, %s216
      %p228 = scmp.eq.s32.totalorder %s33, 1
      %p229 = por %p227, %p228
      %p231 = scmp.ne.s32.totalorder %s216, %s230
      %p232 = scmp.eq.s32.totalorder %s33, 0
      %p233 = por %p231, %p232
      %s235 = sadd.s32 %s234, 1
      %p238 = scmp.eq.s32.totalorder %s27, 1
      %p239 = scmp.ne.s32.totalorder %s234, %s236
      %p240 = scmp.eq.s32.totalorder %s27, 0
      %p241 = por %p239, %p240
      %p242 = scmp.ne.s32.totalorder %s234, %s236
      %p243 = scmp.eq.s32.totalorder %s32, 1
      %p244 = por %p242, %p243
      %p245 = scmp.ne.s32.totalorder %s236, %s237
      %p246 = scmp.eq.s32.totalorder %s32, 0
      %p247 = por %p245, %p246
      %p248 = scmp.ne.s32.totalorder %s236, %s237
      %p249 = scmp.eq.s32.totalorder %s33, 1
      %p250 = por %p248, %p249
      %p252 = scmp.ne.s32.totalorder %s237, %s251
      %p253 = scmp.eq.s32.totalorder %s33, 0
      %p254 = por %p252, %p253
      %s255 = ssub.s32 %s27, %s34
      %p256 = scmp.eq.s32.totalorder %s255, 0
      %s258 = sadd.s32 %s257, 1
      %s259 = scalar_select %p256, %s257, %s258
      %p262 = pneg %p256
      %p263 = scmp.eq.s32.totalorder %s27, 1
      %p264 = por %p262, %p263
      %p265 = scmp.ne.s32.totalorder %s257, %s260
      %p266 = scmp.eq.s32.totalorder %s27, 0
      %p267 = por %p265, %p266
      %p268 = scmp.ne.s32.totalorder %s257, %s260
      %p269 = scmp.eq.s32.totalorder %s32, 1
      %p270 = por %p268, %p269
      %p271 = scmp.ne.s32.totalorder %s260, %s261
      %p272 = scmp.eq.s32.totalorder %s32, 0
      %p273 = por %p271, %p272
      %p274 = scmp.ne.s32.totalorder %s260, %s261
      %p275 = scmp.eq.s32.totalorder %s33, 1
      %p276 = por %p274, %p275
      %p278 = scmp.ne.s32.totalorder %s261, %s277
      %p279 = scmp.eq.s32.totalorder %s33, 0
      %p280 = por %p278, %p279
      %p281 = scmp.le.s32.totalorder 1, %s27
      %p282 = scmp.lt.s32.totalorder %s27, 3
      %p283 = pnand %p281, %p282
      %p284 = pneg %p283
      // Predicated region
      $region9: #{tpu_custom_call.1} parent=5 // pred_check
        _
      $region10: #{tpu_custom_call.1} parent=5 // pred_check_branch
        %286 = sbr.rel (%p283) target = $region12
      $region11: #{tpu_custom_call.1} parent=5 // pred_region
        %s287 = ssub.s32 %s27, 1
        // Predicated region
        $region13: #{tpu_custom_call.1} parent=11 // pred_check
          %p288 = pneg %p100
        $region14: #{tpu_custom_call.1} parent=11 // pred_check_branch
          %290 = sbr.rel (%p288) target = $region16
        $region15: #{tpu_custom_call.1} parent=11 // pred_region
          %s292 = ssub.s32 1024, 1024
          %293 = vsyncadd [#allocation6], %s292
          %s294 = sshll.u32 [#allocation7], 4
          %s295 = int_to_ptr.vmem [resolvable:$true] %s294
          %300 = dma.hbm_to_vmem [thread:$0]  %s2, 1024, %s295, [#allocation6], 64, 64, 4
        $region16: #{tpu_custom_call.1} parent=11 // pred_fallthru
          _
        // Predicated region
        $region17: #{tpu_custom_call.1} parent=11 // pred_check
          %p301 = pneg %p121
        $region18: #{tpu_custom_call.1} parent=11 // pred_check_branch
          %303 = sbr.rel (%p301) target = $region20
        $region19: #{tpu_custom_call.1} parent=11 // pred_region
          _
        $region20: #{tpu_custom_call.1} parent=11 // pred_fallthru
          _
        // Predicated region
        $region21: #{tpu_custom_call.1} parent=11 // pred_check
          %p304 = pneg %p142
        $region22: #{tpu_custom_call.1} parent=11 // pred_check_branch
          %306 = sbr.rel (%p304) target = $region24
        $region23: #{tpu_custom_call.1} parent=11 // pred_region
          %s308 = ssub.s32 1024, 1024
          %309 = vsyncadd [#allocation9], %s308
          %s310 = sshll.u32 [#allocation8], 4
          %s311 = int_to_ptr.vmem [resolvable:$true] %s310
          %316 = dma.hbm_to_vmem [thread:$0]  %s4, 1024, %s311, [#allocation9], 64, 64, 4
        $region24: #{tpu_custom_call.1} parent=11 // pred_fallthru
          _
        // Predicated region
        $region25: #{tpu_custom_call.1} parent=11 // pred_check
          %p317 = pneg %p163
        $region26: #{tpu_custom_call.1} parent=11 // pred_check_branch
          %319 = sbr.rel (%p317) target = $region28
        $region27: #{tpu_custom_call.1} parent=11 // pred_region
          _
        $region28: #{tpu_custom_call.1} parent=11 // pred_fallthru
          _
        // Predicated region
        $region29: #{tpu_custom_call.1} parent=11 // pred_check
          %p320 = pneg %p184
        $region30: #{tpu_custom_call.1} parent=11 // pred_check_branch
          %322 = sbr.rel (%p320) target = $region32
        $region31: #{tpu_custom_call.1} parent=11 // pred_region
          %s324 = ssub.s32 1024, 1024
          %325 = vsyncadd [#allocation9], %s324
          %s326 = sshll.u32 [#allocation10], 4
          %s327 = int_to_ptr.vmem [resolvable:$true] %s326
          %332 = dma.hbm_to_vmem [thread:$0]  %s6, 1024, %s327, [#allocation9], 64, 64, 4
        $region32: #{tpu_custom_call.1} parent=11 // pred_fallthru
          _
        // Predicated region
        $region33: #{tpu_custom_call.1} parent=11 // pred_check
          %p333 = pneg %p205
        $region34: #{tpu_custom_call.1} parent=11 // pred_check_branch
          %335 = sbr.rel (%p333) target = $region36
        $region35: #{tpu_custom_call.1} parent=11 // pred_region
          _
        $region36: #{tpu_custom_call.1} parent=11 // pred_fallthru
          _
        // Predicated region
        $region37: #{tpu_custom_call.1} parent=11 // pred_check
          %p336 = pneg %p226
        $region38: #{tpu_custom_call.1} parent=11 // pred_check_branch
          %338 = sbr.rel (%p336) target = $region40
        $region39: #{tpu_custom_call.1} parent=11 // pred_region
          %s340 = ssub.s32 1024, 1024
          %341 = vsyncadd [#allocation12], %s340
          %s342 = sshll.u32 [#allocation11], 4
          %s343 = int_to_ptr.vmem [resolvable:$true] %s342
          %348 = dma.hbm_to_vmem [thread:$0]  %s8, 1024, %s343, [#allocation12], 64, 64, 4
        $region40: #{tpu_custom_call.1} parent=11 // pred_fallthru
          _
        // Predicated region
        $region41: #{tpu_custom_call.1} parent=11 // pred_check
          %p349 = pneg %p247
        $region42: #{tpu_custom_call.1} parent=11 // pred_check_branch
          %351 = sbr.rel (%p349) target = $region44
        $region43: #{tpu_custom_call.1} parent=11 // pred_region
          _
        $region44: #{tpu_custom_call.1} parent=11 // pred_fallthru
          _
      $region12: #{tpu_custom_call.1} parent=5 // pred_fallthru
        _
      %p352 = scmp.lt.s32.totalorder %s27, 2
      // Predicated region
      $region45: #{tpu_custom_call.1} parent=5 // pred_check
        %p353 = pneg %p352
      $region46: #{tpu_custom_call.1} parent=5 // pred_check_branch
        %355 = sbr.rel (%p353) target = $region48
      $region47: #{tpu_custom_call.1} parent=5 // pred_region
        // Predicated region
        $region49: #{tpu_custom_call.1} parent=47 // pred_check
          %p356 = pneg %p47
        $region50: #{tpu_custom_call.1} parent=47 // pred_check_branch
          %358 = sbr.rel (%p356) target = $region52
        $region51: #{tpu_custom_call.1} parent=47 // pred_region
          %s359 = sand.u32 %s37, 1
          %s360 = scalar_lea.sflag [#allocation3], %s359
          %s361 = sand.u32 %s37, 1
          %s362 = smul.addr %s361, 16
          %s363 = scalar_lea.vmem [#allocation2], %s362
          %s364 = smul.u32 2, %s27
          %s366 = ssub.s32 256, 256
          %367 = vsyncadd %s360, %s366
          %s368 = smul.addr %s364, 128
          %s369 = scalar_lea.hbm %s0, %s368
          %s370 = sshll.u32 %s363, 4
          %s371 = int_to_ptr.vmem [resolvable:$true] %s370
          %376 = dma.hbm_to_vmem [thread:$0]  %s369, 256, %s371, %s360, 128, 128, 8
        $region52: #{tpu_custom_call.1} parent=47 // pred_fallthru
          _
        // Predicated region
        $region53: #{tpu_custom_call.1} parent=47 // pred_check
          %p377 = pneg %p73
        $region54: #{tpu_custom_call.1} parent=47 // pred_check_branch
          %379 = sbr.rel (%p377) target = $region56
        $region55: #{tpu_custom_call.1} parent=47 // pred_region
          %s380 = sand.u32 %s27, 1
          %s381 = scalar_lea.sflag [#allocation6], %s380
          %s382 = sand.u32 %s63, 1
          %s383 = smul.addr %s382, 8
          %s384 = scalar_lea.vmem [#allocation5], %s383
          %s385 = smul.u32 2, %s27
          %s387 = ssub.s32 128, 128
          %388 = vsyncadd %s381, %s387
          %s389 = smul.addr %s385, 64
          %s390 = scalar_lea.hbm %s1, %s389
          %s391 = sshll.u32 %s384, 4
          %s392 = int_to_ptr.vmem [resolvable:$true] %s391
          %397 = dma.hbm_to_vmem [thread:$0]  %s390, 128, %s392, %s381, 64, 64, 4
        $region56: #{tpu_custom_call.1} parent=47 // pred_fallthru
          _
      $region48: #{tpu_custom_call.1} parent=5 // pred_fallthru
        _
      %p398 = scmp.le.s32.totalorder 1, %s27
      %p399 = scmp.lt.s32.totalorder %s27, 3
      %p400 = pnand %p398, %p399
      %p401 = pneg %p400
      // Predicated region
      $region57: #{tpu_custom_call.1} parent=5 // pred_check
        _
      $region58: #{tpu_custom_call.1} parent=5 // pred_check_branch
        %403 = sbr.rel (%p400) target = $region60
      $region59: #{tpu_custom_call.1} parent=5 // pred_region
        %s404 = ssub.s32 %s27, 1
        %s405 = sand.u32 %s40, 1
        %s406 = scalar_lea.sflag [#allocation3], %s405
        %s407 = sand.u32 %s40, 1
        %s408 = smul.addr %s407, 16
        %s409 = scalar_lea.vmem [#allocation2], %s408
        // Predicated region
        $region61: #{tpu_custom_call.1} parent=59 // pred_check
          %p410 = pneg %p53
        $region62: #{tpu_custom_call.1} parent=59 // pred_check_branch
          %412 = sbr.rel (%p410) target = $region64
        $region63: #{tpu_custom_call.1} parent=59 // pred_region
          %413 = dma.done %s406, 256
        $region64: #{tpu_custom_call.1} parent=59 // pred_fallthru
          _
        %s414 = sand.u32 %s32, 1
        %s415 = scalar_lea.sflag [#allocation6], %s414
        %s416 = sand.u32 %s66, 1
        %s417 = smul.addr %s416, 8
        %s418 = scalar_lea.vmem [#allocation5], %s417
        // Predicated region
        $region65: #{tpu_custom_call.1} parent=59 // pred_check
          %p419 = pneg %p79
        $region66: #{tpu_custom_call.1} parent=59 // pred_check_branch
          %421 = sbr.rel (%p419) target = $region68
        $region67: #{tpu_custom_call.1} parent=59 // pred_region
          %422 = dma.done %s415, 128
        $region68: #{tpu_custom_call.1} parent=59 // pred_fallthru
          _
        // Predicated region
        $region69: #{tpu_custom_call.1} parent=59 // pred_check
          %p423 = pneg %p100
        $region70: #{tpu_custom_call.1} parent=59 // pred_check_branch
          %425 = sbr.rel (%p423) target = $region72
        $region71: #{tpu_custom_call.1} parent=59 // pred_region
          %426 = dma.done [#allocation6], 1024
        $region72: #{tpu_custom_call.1} parent=59 // pred_fallthru
          _
        // Predicated region
        $region73: #{tpu_custom_call.1} parent=59 // pred_check
          %p427 = pneg %p142
        $region74: #{tpu_custom_call.1} parent=59 // pred_check_branch
          %429 = sbr.rel (%p427) target = $region76
        $region75: #{tpu_custom_call.1} parent=59 // pred_region
          %430 = dma.done [#allocation9], 1024
        $region76: #{tpu_custom_call.1} parent=59 // pred_fallthru
          _
        // Predicated region
        $region77: #{tpu_custom_call.1} parent=59 // pred_check
          %p431 = pneg %p184
        $region78: #{tpu_custom_call.1} parent=59 // pred_check_branch
          %433 = sbr.rel (%p431) target = $region80
        $region79: #{tpu_custom_call.1} parent=59 // pred_region
          %434 = dma.done [#allocation9], 1024
        $region80: #{tpu_custom_call.1} parent=59 // pred_fallthru
          _
        // Predicated region
        $region81: #{tpu_custom_call.1} parent=59 // pred_check
          %p435 = pneg %p226
        $region82: #{tpu_custom_call.1} parent=59 // pred_check_branch
          %437 = sbr.rel (%p435) target = $region84
        $region83: #{tpu_custom_call.1} parent=59 // pred_region
          %438 = dma.done [#allocation12], 1024
        $region84: #{tpu_custom_call.1} parent=59 // pred_fallthru
          _
        %s439 = sand.u32 %s40, 1
        %s440 = scalar_lea.sflag [#allocation3], %s439
        %s441 = sand.u32 %s40, 1
        %s442 = smul.addr %s441, 16
        %s443 = scalar_lea.vmem [#allocation2], %s442
        %p444 = pneg %p53
        %p445 = pneg %p50
        %s446 = sand.u32 %s32, 1
        %s447 = scalar_lea.sflag [#allocation6], %s446
        %s448 = sand.u32 %s66, 1
        %s449 = smul.addr %s448, 8
        %s450 = scalar_lea.vmem [#allocation5], %s449
        %p451 = pneg %p79
        %p452 = pneg %p76
        %p453 = pneg %p100
        %p454 = pneg %p97
        %p455 = pneg %p121
        %p456 = pneg %p118
        %p457 = pneg %p142
        %p458 = pneg %p139
        %p459 = pneg %p163
        %p460 = pneg %p160
        %p461 = pneg %p184
        %p462 = pneg %p181
        %p463 = pneg %p205
        %p464 = pneg %p202
        %p465 = pneg %p226
        %p466 = pneg %p223
        %p467 = pneg %p247
        %p468 = pneg %p244
        %p469 = pneg %p273
        %p470 = pneg %p270
        %s471 = sand.u32 %s260, 1
        %s472 = scalar_lea.sflag [#allocation4], %s471
        %s473 = sand.u32 %s260, 1
        %s474 = smul.addr %s473, 16
        %s475 = scalar_lea.vmem [#allocation13], %s474
        %s476 = smul.u32 2, %s32
        %s477 = smul.u32 2, %s32
        %s478 = smul.u32 2, %s32
        %v480 = vld [vmem:[%s409] sm:$0xff]
        %v481 = vld [vmem:[%s409 + $0x8] sm:$0xff]
        %v482 = vpack.c.bf16 %v481, %v480
        %v483 = vld [vmem:[%s418] sm:$0xf]
        %v484 = vld [vmem:[%s418 + $0x4] sm:$0xf]
        %v485 = vld [vmem:[#allocation7] sm:$0xf]
        %v486 = vld [vmem:[#allocation7 + $0x4] sm:$0xf]
        %v487 = vld [vmem:[#allocation7 + $0x8] sm:$0xf]
        %v488 = vld [vmem:[#allocation7 + $0xc] sm:$0xf]
        %v489 = vld [vmem:[#allocation7 + $0x10] sm:$0xf]
        %v490 = vld [vmem:[#allocation7 + $0x14] sm:$0xf]
        %v491 = vld [vmem:[#allocation7 + $0x18] sm:$0xf]
        %v492 = vld [vmem:[#allocation7 + $0x1c] sm:$0xf]
        %v493 = vld [vmem:[#allocation7 + $0x20] sm:$0xf]
        %v494 = vld [vmem:[#allocation7 + $0x24] sm:$0xf]
        %v495 = vld [vmem:[#allocation7 + $0x28] sm:$0xf]
        %v496 = vld [vmem:[#allocation7 + $0x2c] sm:$0xf]
        %v497 = vld [vmem:[#allocation7 + $0x30] sm:$0xf]
        %v498 = vld [vmem:[#allocation7 + $0x34] sm:$0xf]
        %v499 = vld [vmem:[#allocation7 + $0x38] sm:$0xf]
        %v500 = vld [vmem:[#allocation7 + $0x3c] sm:$0xf]
        %v501 = vld [vmem:[%s3] sm:$0x1]
        %v503 = vlaneseq
        %v504 = vshrl.u32 %v503, 7
        %v505 = vsub.s32 0, %v504
        %v506 = vrot.slane %v501, %v505
        %v524 = vunpack.c.l.b16 %v485
        %v525 = vunpack.c.l.b16 %v486
        %v526 = vunpack.c.l.b16 %v487
        %v527 = vunpack.c.l.b16 %v488
        %v528 = vunpack.c.l.b16 %v489
        %v529 = vunpack.c.l.b16 %v490
        %v530 = vunpack.c.l.b16 %v491
        %v531 = vunpack.c.l.b16 %v492
        %v532 = vunpack.c.l.b16 %v493
        %v533 = vunpack.c.l.b16 %v494
        %v534 = vunpack.c.l.b16 %v495
        %v535 = vunpack.c.l.b16 %v496
        %v536 = vunpack.c.l.b16 %v497
        %v537 = vunpack.c.l.b16 %v498
        %v538 = vunpack.c.l.b16 %v499
        %v539 = vunpack.c.l.b16 %v500
        %v540 = vpack.c.b16 %v525, %v524
        %v541 = vpack.c.b16 %v527, %v526
        %v542 = vpack.c.b16 %v529, %v528
        %v543 = vpack.c.b16 %v531, %v530
        %v544 = vpack.c.b16 %v533, %v532
        %v545 = vpack.c.b16 %v535, %v534
        %v546 = vpack.c.b16 %v537, %v536
        %v547 = vpack.c.b16 %v539, %v538
        %556 = vmatprep.subr.bf16.mxu0 0
        %557 = vmatpush1.bf16.msra.mxu0 %v540
        %558 = vmatprep.subr.bf16.mxu0 0
        %559 = vmatpush1.bf16.msra.mxu0 %v541
        %560 = vmatprep.subr.bf16.mxu0 0
        %561 = vmatpush1.bf16.msra.mxu0 %v542
        %562 = vmatprep.subr.bf16.mxu0 0
        %563 = vmatpush1.bf16.msra.mxu0 %v543
        %564 = vmatprep.subr.bf16.mxu0 0
        %565 = vmatpush1.bf16.msra.mxu0 %v544
        %566 = vmatprep.subr.bf16.mxu0 0
        %567 = vmatpush1.bf16.msra.mxu0 %v545
        %568 = vmatprep.subr.bf16.mxu0 0
        %569 = vmatpush1.bf16.msra.mxu0 %v546
        %570 = vmatprep.subr.bf16.mxu0 0
        %571 = vmatpush1.bf16.msra.mxu0 %v547
        %572 = vmatprep.subr.bf16.mxu0 0
        %573 = vmatpush1.bf16.msra.mxu0 0
        %574 = vmatprep.subr.bf16.mxu0 0
        %575 = vmatpush1.bf16.msra.mxu0 0
        %576 = vmatprep.subr.bf16.mxu0 0
        %577 = vmatpush1.bf16.msra.mxu0 0
        %578 = vmatprep.subr.bf16.mxu0 0
        %579 = vmatpush1.bf16.msra.mxu0 0
        %580 = vmatprep.subr.bf16.mxu0 0
        %581 = vmatpush1.bf16.msra.mxu0 0
        %582 = vmatprep.subr.bf16.mxu0 0
        %583 = vmatpush1.bf16.msra.mxu0 0
        %584 = vmatprep.subr.bf16.mxu0 0
        %585 = vmatpush1.bf16.msra.mxu0 0
        %586 = vmatprep.subr.bf16.mxu0 0
        %587 = vmatpush1.bf16.msra.mxu0 0
        %588 = vmatprep.mubr.bf16.mxu0 0
        %589 = vmatmul.mubr.bf16.gmra.mrb[0].mxu0 %v482
        %v590 = vpop.f32.mrb[0].mxu0
        %v591 = vadd.f32 %v506, %v590
        %v592 = vpop.f32.mrb[0].mxu0
        %v593 = vpop.f32.mrb[0].mxu0
        %v594 = vadd.f32 %v506, %v593
        %v595 = vpop.f32.mrb[0].mxu0
        %596 = vdwg.mxu0
        %v597 = vld [vmem:[#allocation8] sm:$0xf]
        %v598 = vld [vmem:[#allocation8 + $0x4] sm:$0xf]
        %v599 = vld [vmem:[#allocation8 + $0x8] sm:$0xf]
        %v600 = vld [vmem:[#allocation8 + $0xc] sm:$0xf]
        %v601 = vld [vmem:[#allocation8 + $0x10] sm:$0xf]
        %v602 = vld [vmem:[#allocation8 + $0x14] sm:$0xf]
        %v603 = vld [vmem:[#allocation8 + $0x18] sm:$0xf]
        %v604 = vld [vmem:[#allocation8 + $0x1c] sm:$0xf]
        %v605 = vld [vmem:[#allocation8 + $0x20] sm:$0xf]
        %v606 = vld [vmem:[#allocation8 + $0x24] sm:$0xf]
        %v607 = vld [vmem:[#allocation8 + $0x28] sm:$0xf]
        %v608 = vld [vmem:[#allocation8 + $0x2c] sm:$0xf]
        %v609 = vld [vmem:[#allocation8 + $0x30] sm:$0xf]
        %v610 = vld [vmem:[#allocation8 + $0x34] sm:$0xf]
        %v611 = vld [vmem:[#allocation8 + $0x38] sm:$0xf]
        %v612 = vld [vmem:[#allocation8 + $0x3c] sm:$0xf]
        %v613 = vld [vmem:[%s5] sm:$0x1]
        %v615 = vlaneseq
        %v616 = vshrl.u32 %v615, 7
        %v617 = vsub.s32 0, %v616
        %v618 = vrot.slane %v613, %v617
        %v622 = vunpack.c.l.b16 %v483
        %v623 = vunpack.c.l.b16 %v484
        %v624 = vpack.c.b16 %v623, %v622
        %v642 = vunpack.c.l.b16 %v597
        %v643 = vunpack.c.l.b16 %v598
        %v644 = vunpack.c.l.b16 %v599
        %v645 = vunpack.c.l.b16 %v600
        %v646 = vunpack.c.l.b16 %v601
        %v647 = vunpack.c.l.b16 %v602
        %v648 = vunpack.c.l.b16 %v603
        %v649 = vunpack.c.l.b16 %v604
        %v650 = vunpack.c.l.b16 %v605
        %v651 = vunpack.c.l.b16 %v606
        %v652 = vunpack.c.l.b16 %v607
        %v653 = vunpack.c.l.b16 %v608
        %v654 = vunpack.c.l.b16 %v609
        %v655 = vunpack.c.l.b16 %v610
        %v656 = vunpack.c.l.b16 %v611
        %v657 = vunpack.c.l.b16 %v612
        %v658 = vpack.c.b16 %v643, %v642
        %v659 = vpack.c.b16 %v645, %v644
        %v660 = vpack.c.b16 %v647, %v646
        %v661 = vpack.c.b16 %v649, %v648
        %v662 = vpack.c.b16 %v651, %v650
        %v663 = vpack.c.b16 %v653, %v652
        %v664 = vpack.c.b16 %v655, %v654
        %v665 = vpack.c.b16 %v657, %v656
        %674 = vmatprep.subr.bf16.mxu0 0
        %675 = vmatpush1.bf16.msra.mxu0 %v658
        %676 = vmatprep.subr.bf16.mxu0 0
        %677 = vmatpush1.bf16.msra.mxu0 %v659
        %678 = vmatprep.subr.bf16.mxu0 0
        %679 = vmatpush1.bf16.msra.mxu0 %v660
        %680 = vmatprep.subr.bf16.mxu0 0
        %681 = vmatpush1.bf16.msra.mxu0 %v661
        %682 = vmatprep.subr.bf16.mxu0 0
        %683 = vmatpush1.bf16.msra.mxu0 %v662
        %684 = vmatprep.subr.bf16.mxu0 0
        %685 = vmatpush1.bf16.msra.mxu0 %v663
        %686 = vmatprep.subr.bf16.mxu0 0
        %687 = vmatpush1.bf16.msra.mxu0 %v664
        %688 = vmatprep.subr.bf16.mxu0 0
        %689 = vmatpush1.bf16.msra.mxu0 %v665
        %690 = vmatprep.subr.bf16.mxu0 0
        %691 = vmatpush1.bf16.msra.mxu0 0
        %692 = vmatprep.subr.bf16.mxu0 0
        %693 = vmatpush1.bf16.msra.mxu0 0
        %694 = vmatprep.subr.bf16.mxu0 0
        %695 = vmatpush1.bf16.msra.mxu0 0
        %696 = vmatprep.subr.bf16.mxu0 0
        %697 = vmatpush1.bf16.msra.mxu0 0
        %698 = vmatprep.subr.bf16.mxu0 0
        %699 = vmatpush1.bf16.msra.mxu0 0
        %700 = vmatprep.subr.bf16.mxu0 0
        %701 = vmatpush1.bf16.msra.mxu0 0
        %702 = vmatprep.subr.bf16.mxu0 0
        %703 = vmatpush1.bf16.msra.mxu0 0
        %704 = vmatprep.subr.bf16.mxu0 0
        %705 = vmatpush1.bf16.msra.mxu0 0
        %706 = vmatprep.mubr.bf16.mxu0 0
        %707 = vmatmul.mubr.bf16.gmra.mrb[0].mxu0 %v624
        %v708 = vpop.f32.mrb[0].mxu0
        %v709 = vadd.f32 %v618, %v708
        %v710 = vpop.f32.mrb[0].mxu0
        %v711 = vpop.f32.mrb[0].mxu0
        %v712 = vadd.f32 %v618, %v711
        %v713 = vpop.f32.mrb[0].mxu0
        %714 = vdwg.mxu0
        %v715 = vld [vmem:[#allocation10] sm:$0xf]
        %v716 = vld [vmem:[#allocation10 + $0x4] sm:$0xf]
        %v717 = vld [vmem:[#allocation10 + $0x8] sm:$0xf]
        %v718 = vld [vmem:[#allocation10 + $0xc] sm:$0xf]
        %v719 = vld [vmem:[#allocation10 + $0x10] sm:$0xf]
        %v720 = vld [vmem:[#allocation10 + $0x14] sm:$0xf]
        %v721 = vld [vmem:[#allocation10 + $0x18] sm:$0xf]
        %v722 = vld [vmem:[#allocation10 + $0x1c] sm:$0xf]
        %v723 = vld [vmem:[#allocation10 + $0x20] sm:$0xf]
        %v724 = vld [vmem:[#allocation10 + $0x24] sm:$0xf]
        %v725 = vld [vmem:[#allocation10 + $0x28] sm:$0xf]
        %v726 = vld [vmem:[#allocation10 + $0x2c] sm:$0xf]
        %v727 = vld [vmem:[#allocation10 + $0x30] sm:$0xf]
        %v728 = vld [vmem:[#allocation10 + $0x34] sm:$0xf]
        %v729 = vld [vmem:[#allocation10 + $0x38] sm:$0xf]
        %v730 = vld [vmem:[#allocation10 + $0x3c] sm:$0xf]
        %v731 = vld [vmem:[%s7] sm:$0x1]
        %v733 = vlaneseq
        %v734 = vshrl.u32 %v733, 7
        %v735 = vsub.s32 0, %v734
        %v736 = vrot.slane %v731, %v735
        %v754 = vunpack.c.l.b16 %v715
        %v755 = vunpack.c.l.b16 %v716
        %v756 = vunpack.c.l.b16 %v717
        %v757 = vunpack.c.l.b16 %v718
        %v758 = vunpack.c.l.b16 %v719
        %v759 = vunpack.c.l.b16 %v720
        %v760 = vunpack.c.l.b16 %v721
        %v761 = vunpack.c.l.b16 %v722
        %v762 = vunpack.c.l.b16 %v723
        %v763 = vunpack.c.l.b16 %v724
        %v764 = vunpack.c.l.b16 %v725
        %v765 = vunpack.c.l.b16 %v726
        %v766 = vunpack.c.l.b16 %v727
        %v767 = vunpack.c.l.b16 %v728
        %v768 = vunpack.c.l.b16 %v729
        %v769 = vunpack.c.l.b16 %v730
        %v770 = vpack.c.b16 %v755, %v754
        %v771 = vpack.c.b16 %v757, %v756
        %v772 = vpack.c.b16 %v759, %v758
        %v773 = vpack.c.b16 %v761, %v760
        %v774 = vpack.c.b16 %v763, %v762
        %v775 = vpack.c.b16 %v765, %v764
        %v776 = vpack.c.b16 %v767, %v766
        %v777 = vpack.c.b16 %v769, %v768
        %786 = vmatprep.subr.bf16.mxu0 0
        %787 = vmatpush1.bf16.msra.mxu0 %v770
        %788 = vmatprep.subr.bf16.mxu0 0
        %789 = vmatpush1.bf16.msra.mxu0 %v771
        %790 = vmatprep.subr.bf16.mxu0 0
        %791 = vmatpush1.bf16.msra.mxu0 %v772
        %792 = vmatprep.subr.bf16.mxu0 0
        %793 = vmatpush1.bf16.msra.mxu0 %v773
        %794 = vmatprep.subr.bf16.mxu0 0
        %795 = vmatpush1.bf16.msra.mxu0 %v774
        %796 = vmatprep.subr.bf16.mxu0 0
        %797 = vmatpush1.bf16.msra.mxu0 %v775
        %798 = vmatprep.subr.bf16.mxu0 0
        %799 = vmatpush1.bf16.msra.mxu0 %v776
        %800 = vmatprep.subr.bf16.mxu0 0
        %801 = vmatpush1.bf16.msra.mxu0 %v777
        %802 = vmatprep.subr.bf16.mxu0 0
        %803 = vmatpush1.bf16.msra.mxu0 0
        %804 = vmatprep.subr.bf16.mxu0 0
        %805 = vmatpush1.bf16.msra.mxu0 0
        %806 = vmatprep.subr.bf16.mxu0 0
        %807 = vmatpush1.bf16.msra.mxu0 0
        %808 = vmatprep.subr.bf16.mxu0 0
        %809 = vmatpush1.bf16.msra.mxu0 0
        %810 = vmatprep.subr.bf16.mxu0 0
        %811 = vmatpush1.bf16.msra.mxu0 0
        %812 = vmatprep.subr.bf16.mxu0 0
        %813 = vmatpush1.bf16.msra.mxu0 0
        %814 = vmatprep.subr.bf16.mxu0 0
        %815 = vmatpush1.bf16.msra.mxu0 0
        %816 = vmatprep.subr.bf16.mxu0 0
        %817 = vmatpush1.bf16.msra.mxu0 0
        %818 = vmatprep.mubr.bf16.mxu0 0
        %819 = vmatmul.mubr.bf16.gmra.mrb[0].mxu0 %v624
        %v820 = vpop.f32.mrb[0].mxu0
        %v821 = vadd.f32 %v736, %v820
        %v822 = vpop.f32.mrb[0].mxu0
        %v823 = vpop.f32.mrb[0].mxu0
        %v824 = vadd.f32 %v736, %v823
        %v825 = vpop.f32.mrb[0].mxu0
        %826 = vdwg.mxu0
        %v829 = vcombine.high %v709, %v709
        %v830 = vcombine.high %v712, %v712
        %vm833 = vcmask 1043456
        %v834 = vsel %vm833, %v709, -inf
        %v835 = vrot.slane %v834, 4
        %v836 = vmax.f32 %v834, %v835
        %v837 = vrot.slane %v836, 2
        %v838 = vmax.f32 %v836, %v837
        %v839 = vrot.slane %v838, 1
        %v840 = vmax.f32 %v838, %v839
        %v841 = vsel %vm833, %v829, -inf
        %v842 = vrot.slane %v841, 4
        %v843 = vmax.f32 %v841, %v842
        %v844 = vrot.slane %v843, 2
        %v845 = vmax.f32 %v843, %v844
        %v846 = vrot.slane %v845, 1
        %v847 = vmax.f32 %v845, %v846
        %v848 = vsel %vm833, %v712, -inf
        %v849 = vrot.slane %v848, 4
        %v850 = vmax.f32 %v848, %v849
        %v851 = vrot.slane %v850, 2
        %v852 = vmax.f32 %v850, %v851
        %v853 = vrot.slane %v852, 1
        %v854 = vmax.f32 %v852, %v853
        %v855 = vsel %vm833, %v830, -inf
        %v856 = vrot.slane %v855, 4
        %v857 = vmax.f32 %v855, %v856
        %v858 = vrot.slane %v857, 2
        %v859 = vmax.f32 %v857, %v858
        %v860 = vrot.slane %v859, 1
        %v861 = vmax.f32 %v859, %v860
        %v864 = vcombine.high %v821, %v821
        %v865 = vcombine.high %v824, %v824
        %v868 = vsel %vm833, %v821, -inf
        %v869 = vrot.slane %v868, 4
        %v870 = vmax.f32 %v868, %v869
        %v871 = vrot.slane %v870, 2
        %v872 = vmax.f32 %v870, %v871
        %v873 = vrot.slane %v872, 1
        %v874 = vmax.f32 %v872, %v873
        %v875 = vsel %vm833, %v864, -inf
        %v876 = vrot.slane %v875, 4
        %v877 = vmax.f32 %v875, %v876
        %v878 = vrot.slane %v877, 2
        %v879 = vmax.f32 %v877, %v878
        %v880 = vrot.slane %v879, 1
        %v881 = vmax.f32 %v879, %v880
        %v882 = vsel %vm833, %v824, -inf
        %v883 = vrot.slane %v882, 4
        %v884 = vmax.f32 %v882, %v883
        %v885 = vrot.slane %v884, 2
        %v886 = vmax.f32 %v884, %v885
        %v887 = vrot.slane %v886, 1
        %v888 = vmax.f32 %v886, %v887
        %v889 = vsel %vm833, %v865, -inf
        %v890 = vrot.slane %v889, 4
        %v891 = vmax.f32 %v889, %v890
        %v892 = vrot.slane %v891, 2
        %v893 = vmax.f32 %v891, %v892
        %v894 = vrot.slane %v893, 1
        %v895 = vmax.f32 %v893, %v894
        %v896 = vpack.c.bf16 %v594, %v591
        %v897 = vpack.c.bf16 %v874, %v874
        %v898 = vpack.c.bf16 %v881, %v881
        %v899 = vpack.c.bf16 %v888, %v888
        %v900 = vpack.c.bf16 %v895, %v895
        %v905 = vunpack.c.l.b16 %v897
        %v906 = vunpack.c.l.b16 %v898
        %v907 = vunpack.c.l.b16 %v899
        %v908 = vunpack.c.l.b16 %v900
        %vm909 = vcmask 1041409
        %v910 = vsel %vm909, %v906, %v905
        %vm911 = vcmask 1042434
        %v912 = vsel %vm911, %v907, %v910
        %vm913 = vcmask 1043459
        %v914 = vsel %vm913, %v908, %v912
        %v915 = vpack.c.b16 %v914, %v914
        %917 = vmatprep.subr.bf16.mxu0 0
        %918 = vmatpush1.bf16.xpose.msra.mxu0 %v915
        %919 = vmatprep.subr.bf16.mxu0 0
        %920 = vmatpush1.bf16.xpose.msra.mxu0 0
        %921 = vmatprep.subr.bf16.mxu0 0
        %922 = vmatpush1.bf16.xpose.msra.mxu0 0
        %923 = vmatprep.subr.bf16.mxu0 0
        %924 = vmatpush1.bf16.xpose.msra.mxu0 0
        %925 = vmatprep.subr.bf16.mxu0 0
        %926 = vmatpush1.bf16.xpose.msra.mxu0 0
        %927 = vmatprep.subr.bf16.mxu0 0
        %928 = vmatpush1.bf16.xpose.msra.mxu0 0
        %929 = vmatprep.subr.bf16.mxu0 0
        %930 = vmatpush1.bf16.xpose.msra.mxu0 0
        %931 = vmatprep.subr.bf16.mxu0 0
        %932 = vmatpush1.bf16.xpose.msra.mxu0 0
        %933 = vmatprep.subr.bf16.mxu0 0
        %934 = vmatpush1.bf16.xpose.msra.mxu0 0
        %935 = vmatprep.subr.bf16.mxu0 0
        %936 = vmatpush1.bf16.xpose.msra.mxu0 0
        %937 = vmatprep.subr.bf16.mxu0 0
        %938 = vmatpush1.bf16.xpose.msra.mxu0 0
        %939 = vmatprep.subr.bf16.mxu0 0
        %940 = vmatpush1.bf16.xpose.msra.mxu0 0
        %941 = vmatprep.subr.bf16.mxu0 0
        %942 = vmatpush1.bf16.xpose.msra.mxu0 0
        %943 = vmatprep.subr.bf16.mxu0 0
        %944 = vmatpush1.bf16.xpose.msra.mxu0 0
        %945 = vmatprep.subr.bf16.mxu0 0
        %946 = vmatpush1.bf16.xpose.msra.mxu0 0
        %947 = vmatprep.subr.bf16.mxu0 0
        %948 = vmatpush1.bf16.xpose.msra.mxu0 0
        %949 = vmatprep.mubr.bf16.mxu0 0
        %950 = vmatmul.mubr.bf16.gmra.mrb[0].mxu0 %v896
        %v951 = vpop.f32.mrb[0].mxu0
        %v952 = vadd.f32 0.0, %v951
        %v953 = vpop.f32.mrb[0].mxu0
        %v954 = vpop.f32.mrb[0].mxu0
        %v955 = vadd.f32 0.0, %v954
        %v956 = vpop.f32.mrb[0].mxu0
        %957 = vdwg.mxu0
        %vm958 = vcmask 31744
        %v959 = vsel %vm958, %v952, -inf
        %960 = vmax.xlane.f32.xlu0 %v959
        %v961 = vpop.xlane.xlu0 %960
        %v962 = vsel %vm958, %v955, -inf
        %963 = vmax.xlane.f32.xlu0 %v962
        %v964 = vpop.xlane.xlu0 %963
        %v965 = vsub.f32 %v952, %v961
        %v966 = vsub.f32 %v955, %v964
        %v967 = vmul.f32 %v965, 1.442695
        %v968 = vpow.pop %v967
        %v969 = vmul.f32 %v966, 1.442695
        %v970 = vpow.pop %v969
        %v971 = vsel %vm958, %v968, 0.0
        %972 = vadd.xlane.f32.xlu0 %v971
        %v973 = vpop.xlane.xlu0 %972
        %v974 = vsel %vm958, %v970, 0.0
        %975 = vadd.xlane.f32.xlu0 %v974
        %v976 = vpop.xlane.xlu0 %975
        %v977 = vrcp.pop %v973
        %v978 = vrcp.pop %v976
        %v979 = vmul.f32 %v968, %v977
        %v980 = vmul.f32 %v970, %v978
        %v981 = vpack.c.bf16 %v980, %v979
        %v982 = vpack.c.bf16 %v840, %v840
        %v983 = vpack.c.bf16 %v847, %v847
        %v984 = vpack.c.bf16 %v854, %v854
        %v985 = vpack.c.bf16 %v861, %v861
        %v990 = vunpack.c.l.b16 %v982
        %v991 = vunpack.c.l.b16 %v983
        %v992 = vunpack.c.l.b16 %v984
        %v993 = vunpack.c.l.b16 %v985
        %v994 = vsel %vm909, %v991, %v990
        %v995 = vsel %vm911, %v992, %v994
        %v996 = vsel %vm913, %v993, %v995
        %v997 = vpack.c.b16 %v996, %v996
        %v999 = vsel %vm958, %v981, 0
        %vm1001 = vcmask 1041408
        %v1003 = vsel %vm1001, %v997, 0
        %1005 = vmatprep.subr.bf16.mxu0 0
        %1006 = vmatpush1.bf16.msra.mxu0 %v1003
        %1007 = vmatprep.subr.bf16.mxu0 0
        %1008 = vmatpush1.bf16.msra.mxu0 0
        %1009 = vmatprep.subr.bf16.mxu0 0
        %1010 = vmatpush1.bf16.msra.mxu0 0
        %1011 = vmatprep.subr.bf16.mxu0 0
        %1012 = vmatpush1.bf16.msra.mxu0 0
        %1013 = vmatprep.subr.bf16.mxu0 0
        %1014 = vmatpush1.bf16.msra.mxu0 0
        %1015 = vmatprep.subr.bf16.mxu0 0
        %1016 = vmatpush1.bf16.msra.mxu0 0
        %1017 = vmatprep.subr.bf16.mxu0 0
        %1018 = vmatpush1.bf16.msra.mxu0 0
        %1019 = vmatprep.subr.bf16.mxu0 0
        %1020 = vmatpush1.bf16.msra.mxu0 0
        %1021 = vmatprep.subr.bf16.mxu0 0
        %1022 = vmatpush1.bf16.msra.mxu0 0
        %1023 = vmatprep.subr.bf16.mxu0 0
        %1024 = vmatpush1.bf16.msra.mxu0 0
        %1025 = vmatprep.subr.bf16.mxu0 0
        %1026 = vmatpush1.bf16.msra.mxu0 0
        %1027 = vmatprep.subr.bf16.mxu0 0
        %1028 = vmatpush1.bf16.msra.mxu0 0
        %1029 = vmatprep.subr.bf16.mxu0 0
        %1030 = vmatpush1.bf16.msra.mxu0 0
        %1031 = vmatprep.subr.bf16.mxu0 0
        %1032 = vmatpush1.bf16.msra.mxu0 0
        %1033 = vmatprep.subr.bf16.mxu0 0
        %1034 = vmatpush1.bf16.msra.mxu0 0
        %1035 = vmatprep.subr.bf16.mxu0 0
        %1036 = vmatpush1.bf16.msra.mxu0 0
        %1037 = vmatprep.mubr.bf16.mxu0 0
        %1038 = vmatmul.mubr.bf16.gmra.mrb[0].mxu0 %v999
        %v1039 = vpop.f32.mrb[0].mxu0
        %v1040 = vadd.f32 0.0, %v1039
        %v1041 = vpop.f32.mrb[0].mxu0
        %v1042 = vpop.f32.mrb[0].mxu0
        %v1043 = vadd.f32 0.0, %v1042
        %v1044 = vpop.f32.mrb[0].mxu0
        %1045 = vdwg.mxu0
        %v1046 = vpack.c.bf16 %v1043, %v1040
        %v1047 = vld [vmem:[#allocation11] sm:$0xf]
        %v1048 = vld [vmem:[#allocation11 + $0x4] sm:$0xf]
        %v1049 = vld [vmem:[#allocation11 + $0x8] sm:$0xf]
        %v1050 = vld [vmem:[#allocation11 + $0xc] sm:$0xf]
        %v1051 = vld [vmem:[#allocation11 + $0x10] sm:$0xf]
        %v1052 = vld [vmem:[#allocation11 + $0x14] sm:$0xf]
        %v1053 = vld [vmem:[#allocation11 + $0x18] sm:$0xf]
        %v1054 = vld [vmem:[#allocation11 + $0x1c] sm:$0xf]
        %v1055 = vld [vmem:[#allocation11 + $0x20] sm:$0xf]
        %v1056 = vld [vmem:[#allocation11 + $0x24] sm:$0xf]
        %v1057 = vld [vmem:[#allocation11 + $0x28] sm:$0xf]
        %v1058 = vld [vmem:[#allocation11 + $0x2c] sm:$0xf]
        %v1059 = vld [vmem:[#allocation11 + $0x30] sm:$0xf]
        %v1060 = vld [vmem:[#allocation11 + $0x34] sm:$0xf]
        %v1061 = vld [vmem:[#allocation11 + $0x38] sm:$0xf]
        %v1062 = vld [vmem:[#allocation11 + $0x3c] sm:$0xf]
        %v1063 = vld [vmem:[%s9] sm:$0x1]
        %v1065 = vlaneseq
        %v1066 = vshrl.u32 %v1065, 7
        %v1067 = vsub.s32 0, %v1066
        %v1068 = vrot.slane %v1063, %v1067
        %v1086 = vunpack.c.l.b16 %v1047
        %v1087 = vunpack.c.l.b16 %v1048
        %v1088 = vunpack.c.l.b16 %v1049
        %v1089 = vunpack.c.l.b16 %v1050
        %v1090 = vunpack.c.l.b16 %v1051
        %v1091 = vunpack.c.l.b16 %v1052
        %v1092 = vunpack.c.l.b16 %v1053
        %v1093 = vunpack.c.l.b16 %v1054
        %v1094 = vunpack.c.l.b16 %v1055
        %v1095 = vunpack.c.l.b16 %v1056
        %v1096 = vunpack.c.l.b16 %v1057
        %v1097 = vunpack.c.l.b16 %v1058
        %v1098 = vunpack.c.l.b16 %v1059
        %v1099 = vunpack.c.l.b16 %v1060
        %v1100 = vunpack.c.l.b16 %v1061
        %v1101 = vunpack.c.l.b16 %v1062
        %v1102 = vpack.c.b16 %v1087, %v1086
        %v1103 = vpack.c.b16 %v1089, %v1088
        %v1104 = vpack.c.b16 %v1091, %v1090
        %v1105 = vpack.c.b16 %v1093, %v1092
        %v1106 = vpack.c.b16 %v1095, %v1094
        %v1107 = vpack.c.b16 %v1097, %v1096
        %v1108 = vpack.c.b16 %v1099, %v1098
        %v1109 = vpack.c.b16 %v1101, %v1100
        %1118 = vmatprep.subr.bf16.mxu0 0
        %1119 = vmatpush1.bf16.msra.mxu0 %v1102
        %1120 = vmatprep.subr.bf16.mxu0 0
        %1121 = vmatpush1.bf16.msra.mxu0 %v1103
        %1122 = vmatprep.subr.bf16.mxu0 0
        %1123 = vmatpush1.bf16.msra.mxu0 %v1104
        %1124 = vmatprep.subr.bf16.mxu0 0
        %1125 = vmatpush1.bf16.msra.mxu0 %v1105
        %1126 = vmatprep.subr.bf16.mxu0 0
        %1127 = vmatpush1.bf16.msra.mxu0 %v1106
        %1128 = vmatprep.subr.bf16.mxu0 0
        %1129 = vmatpush1.bf16.msra.mxu0 %v1107
        %1130 = vmatprep.subr.bf16.mxu0 0
        %1131 = vmatpush1.bf16.msra.mxu0 %v1108
        %1132 = vmatprep.subr.bf16.mxu0 0
        %1133 = vmatpush1.bf16.msra.mxu0 %v1109
        %1134 = vmatprep.subr.bf16.mxu0 0
        %1135 = vmatpush1.bf16.msra.mxu0 0
        %1136 = vmatprep.subr.bf16.mxu0 0
        %1137 = vmatpush1.bf16.msra.mxu0 0
        %1138 = vmatprep.subr.bf16.mxu0 0
        %1139 = vmatpush1.bf16.msra.mxu0 0
        %1140 = vmatprep.subr.bf16.mxu0 0
        %1141 = vmatpush1.bf16.msra.mxu0 0
        %1142 = vmatprep.subr.bf16.mxu0 0
        %1143 = vmatpush1.bf16.msra.mxu0 0
        %1144 = vmatprep.subr.bf16.mxu0 0
        %1145 = vmatpush1.bf16.msra.mxu0 0
        %1146 = vmatprep.subr.bf16.mxu0 0
        %1147 = vmatpush1.bf16.msra.mxu0 0
        %1148 = vmatprep.subr.bf16.mxu0 0
        %1149 = vmatpush1.bf16.msra.mxu0 0
        %1150 = vmatprep.mubr.bf16.mxu0 0
        %1151 = vmatmul.mubr.bf16.gmra.mrb[0].mxu0 %v1046
        %v1152 = vpop.f32.mrb[0].mxu0
        %v1153 = vadd.f32 %v1068, %v1152
        %v1154 = vpop.f32.mrb[0].mxu0
        %v1155 = vpop.f32.mrb[0].mxu0
        %v1156 = vadd.f32 %v1068, %v1155
        %v1157 = vpop.f32.mrb[0].mxu0
        %1158 = vdwg.mxu0
        %v1159 = vadd.f32 %v1153, %v480
        %v1160 = vadd.f32 %v1156, %v481
        %1161 = vst [vmem:[%s475] sm:$0xff] %v1159
        %1162 = vst [vmem:[%s475 + $0x8] sm:$0xff] %v1160
        %s1163 = sand.u32 %s260, 1
        %s1164 = scalar_lea.sflag [#allocation4], %s1163
        %s1165 = sand.u32 %s260, 1
        %s1166 = smul.addr %s1165, 16
        %s1167 = scalar_lea.vmem [#allocation13], %s1166
        // Predicated region
        $region85: #{tpu_custom_call.1} parent=59 // pred_check
          %p1168 = pneg %p270
        $region86: #{tpu_custom_call.1} parent=59 // pred_check_branch
          %1170 = sbr.rel (%p1168) target = $region88
        $region87: #{tpu_custom_call.1} parent=59 // pred_region
          %s1171 = smul.u32 2, %s32
          %s1173 = ssub.s32 256, 256
          %1174 = vsyncadd %s1164, %s1173
          %s1175 = smul.addr %s1171, 128
          %s1176 = scalar_lea.hbm %s10, %s1175
          %s1177 = sshll.u32 %s1167, 4
          %s1178 = int_to_ptr.vmem [resolvable:$true] %s1177
          %1183 = dma.vmem_to_hbm [thread:$0]  %s1178, 256, %s1176, %s1164, 128, 128, 8
        $region88: #{tpu_custom_call.1} parent=59 // pred_fallthru
          _
      $region60: #{tpu_custom_call.1} parent=5 // pred_fallthru
        _
      %p1184 = scmp.le.s32.totalorder 2, %s27
      // Predicated region
      $region89: #{tpu_custom_call.1} parent=5 // pred_check
        %p1185 = pneg %p1184
      $region90: #{tpu_custom_call.1} parent=5 // pred_check_branch
        %1187 = sbr.rel (%p1185) target = $region92
      $region91: #{tpu_custom_call.1} parent=5 // pred_region
        %s1188 = ssub.s32 %s27, 2
        // Predicated region
        $region93: #{tpu_custom_call.1} parent=91 // pred_check
          %p1189 = pneg %p276
        $region94: #{tpu_custom_call.1} parent=91 // pred_check_branch
          %1191 = sbr.rel (%p1189) target = $region96
        $region95: #{tpu_custom_call.1} parent=91 // pred_region
          %s1192 = sand.u32 %s261, 1
          %s1193 = scalar_lea.sflag [#allocation4], %s1192
          %s1194 = sand.u32 %s261, 1
          %s1195 = smul.addr %s1194, 16
          %s1196 = scalar_lea.vmem [#allocation13], %s1195
          %1197 = dma.done %s1193, 256
        $region96: #{tpu_custom_call.1} parent=91 // pred_fallthru
          _
      $region92: #{tpu_custom_call.1} parent=5 // pred_fallthru
        _
    $region6: #{tpu_custom_call.1} parent=1 // loop_footer
      %s31 = sadd.s32 1, %s27
    $region7: #{tpu_custom_call.1} parent=1 // loop_footer_branch
      %26 = sbr.rel target = $region3
    $region8: #{tpu_custom_call.1} parent=1 // loop_exit
      _
    %1198 = vsyncpa [#allocation3], 1
    %s1199 = scalar_lea.sflag [#allocation3], 1
    %1200 = vsyncpa %s1199, 1
    %1201 = vsyncpa [#allocation6], 1
    %s1202 = scalar_lea.sflag [#allocation6], 1
    %1203 = vsyncpa %s1202, 1
    %1204 = vsyncpa [#allocation9], 1
    %1205 = vsyncpa [#allocation12], 1
    %1206 = vsyncpa [#allocation4], 1
    %s1207 = scalar_lea.sflag [#allocation4], 1
    %1208 = vsyncpa %s1207, 1

</llo_original>
